<compile_context>
chip_gen: v5e
topology: v5e:2x2
jax: 0.10.0
libtpu: 0.0.40
codegen_flags: <defaults>
</compile_context>

<pallas_src>
import math

import jax
import jax.numpy as jnp
from jax.experimental import pallas as pl
from jax.experimental.pallas import tpu as pltpu

_LANE = 128
_SUBLANE = 8


def _round_up(x, m):
    return ((x + m - 1) // m) * m


def _round_down(x, m):
    return max(m, (x // m) * m)


def _vmem_capacity_bytes():
    try:
        return int(pltpu.get_tpu_info().vmem_capacity_bytes)
    except Exception:
        return 64 * 1024 * 1024  # conservative: v7x per-TensorCore VMEM


def _pad_to(a, shape, dtype):
    """Zero-pad a 2-D array to `shape` and cast to `dtype` (no-op if already there)."""
    if a.shape == tuple(shape) and a.dtype == dtype:
        return a
    out = jnp.zeros(shape, dtype=dtype)
    return out.at[tuple(slice(0, s) for s in a.shape)].set(a.astype(dtype))


# ---------------------------------------------------------------------------
# Kernels
# ---------------------------------------------------------------------------
def _gcn_kernel_fused_w(adj_ref, x_ref, w_ref, b_ref, out_ref, acc_ref):
    """out = (sum_k adj_k @ x_k) @ w + b   (used when F_out >= F_in)."""
    k = pl.program_id(1)

    @pl.when(k == 0)
    def _():
        acc_ref[...] = jnp.zeros_like(acc_ref)

    acc_ref[...] += jnp.dot(adj_ref[...], x_ref[...],
                            preferred_element_type=jnp.float32)

    @pl.when(k == pl.num_programs(1) - 1)
    def _():
        out = jnp.dot(acc_ref[...].astype(w_ref.dtype), w_ref[...],
                      preferred_element_type=jnp.float32)
        out_ref[...] = (out + b_ref[...]).astype(out_ref.dtype)


def _gcn_kernel_pre_w(adj_ref, xw_ref, b_ref, out_ref, acc_ref):
    """out = (sum_k adj_k @ (x @ w)_k) + b  (used when F_out < F_in)."""
    k = pl.program_id(1)

    @pl.when(k == 0)
    def _():
        acc_ref[...] = jnp.zeros_like(acc_ref)

    acc_ref[...] += jnp.dot(adj_ref[...], xw_ref[...],
                            preferred_element_type=jnp.float32)

    @pl.when(k == pl.num_programs(1) - 1)
    def _():
        out_ref[...] = (acc_ref[...] + b_ref[...]).astype(out_ref.dtype)


# ---------------------------------------------------------------------------
# Wrapper
# ---------------------------------------------------------------------------
def graph_convolution(inp, adj, weight, bias=None, *, tm=None, tk=None):
    """Pallas implementation of GraphConvolution.forward(input, adj)."""
    N, f_in = inp.shape
    f_out = weight.shape[1]
    assert adj.shape == (N, N)
    assert weight.shape == (f_in, f_out)

    fi_p = _round_up(f_in, _LANE)
    fo_p = _round_up(f_out, _LANE)

    # Stream adj against the *narrower* right-hand side.
    pre_w = f_out < f_in
    rhs_cols = fo_p if pre_w else fi_p

    # ---- device-aware tile sizing -----------------------------------------
    vmem_cap = _vmem_capacity_bytes()
    budget = int(0.45 * vmem_cap)

    tm = 512 if tm is None else tm
    tk = 512 if tk is None else tk
    tm = _round_up(min(tm, _round_up(N, _SUBLANE)), _SUBLANE)
    tk = _round_up(min(tk, _round_up(N, _LANE)), _LANE)

    def est(tm_, tk_):
        bf16, f32 = 2, 4
        b = 2 * tm_ * tk_ * bf16           # adj stream (double-buffered)
        b += 2 * tk_ * rhs_cols * bf16     # x / (x @ w) stream
        if not pre_w:
            b += 2 * fi_p * fo_p * bf16    # resident weight
        b += 2 * fo_p * f32                # bias
        b += 2 * tm_ * fo_p * f32          # output slab
        b += tm_ * rhs_cols * f32          # accumulator scratch
        return b

    while est(tm, tk) > budget and tk > _LANE:
        tk = _round_down(tk // 2, _LANE)
    while est(tm, tk) > budget and tm > _SUBLANE:
        tm = _round_down(tm // 2, _SUBLANE)

    n_rows = _round_up(N, tm)   # padded output-node axis
    n_k = _round_up(N, tk)      # padded contraction axis

    # ---- operand preparation (bf16 streaming, lane-padded features) -------
    adj_p = _pad_to(adj, (n_rows, n_k), jnp.bfloat16)
    w_p = _pad_to(weight, (fi_p, fo_p), jnp.bfloat16)
    if pre_w:
        x_p = _pad_to(inp, (n_k, fi_p), jnp.bfloat16)
        rhs = jnp.dot(x_p, w_p,
                      preferred_element_type=jnp.float32).astype(jnp.bfloat16)
    else:
        rhs = _pad_to(inp, (n_k, fi_p), jnp.bfloat16)

    if bias is None:
        b_p = jnp.zeros((1, fo_p), jnp.float32)
    else:
        b_p = _pad_to(bias.reshape(1, f_out), (1, fo_p), jnp.float32)

    grid = (n_rows // tm, n_k // tk)

    flops = 2 * N * N * (f_out if pre_w else f_in) + 2 * N * f_in * f_out
    bytes_accessed = (n_rows * n_k * 2 + n_k * rhs_cols * 2
                      + (0 if pre_w else fi_p * fo_p * 2)
                      + fo_p * 4 + n_rows * fo_p * 4)
    cost = pl.CostEstimate(flops=flops, transcendentals=0,
                           bytes_accessed=bytes_accessed)

    compiler_params = pltpu.CompilerParams(
        dimension_semantics=("parallel", "arbitrary"),
        vmem_limit_bytes=min(int(0.9 * vmem_cap),
                             max(32 * 1024 * 1024, 2 * est(tm, tk))),
    )

    adj_spec = pl.BlockSpec((tm, tk), lambda i, k: (i, k))
    rhs_spec = pl.BlockSpec((tk, rhs_cols), lambda i, k: (k, 0))
    # NOTE: weight/bias are grid-invariant; pipeline_mode=pl.Buffered(1) would
    # reclaim their second buffer, but at <=64 KiB it is negligible here.
    w_spec = pl.BlockSpec((fi_p, fo_p), lambda i, k: (0, 0))
    b_spec = pl.BlockSpec((1, fo_p), lambda i, k: (0, 0))
    out_spec = pl.BlockSpec((tm, fo_p), lambda i, k: (i, 0))

    if pre_w:
        kernel = _gcn_kernel_pre_w
        in_specs = [adj_spec, rhs_spec, b_spec]
        operands = (adj_p, rhs, b_p)
    else:
        kernel = _gcn_kernel_fused_w
        in_specs = [adj_spec, rhs_spec, w_spec, b_spec]
        operands = (adj_p, rhs, w_p, b_p)

    out_p = pl.pallas_call(
        kernel,
        out_shape=jax.ShapeDtypeStruct((n_rows, fo_p), jnp.float32),
        grid_spec=pltpu.PrefetchScalarGridSpec(
            num_scalar_prefetch=0,
            grid=grid,
            in_specs=in_specs,
            out_specs=out_spec,
            scratch_shapes=[pltpu.VMEM((tm, rhs_cols), jnp.float32)],
        ),
        compiler_params=compiler_params,
        cost_estimate=cost,
    )(*operands)

    return out_p[:N, :f_out]


def init_params(key, in_features, out_features, bias=True):
    """Deterministic re-implementation of GraphConvolution.reset_parameters."""
    stdv = 1.0 / math.sqrt(out_features)
    kw, kb = jax.random.split(key)
    weight = jax.random.uniform(kw, (in_features, out_features),
                                minval=-stdv, maxval=stdv, dtype=jnp.float32)
    b = (jax.random.uniform(kb, (out_features,),
                            minval=-stdv, maxval=stdv, dtype=jnp.float32)
         if bias else None)
    return weight, b


if __name__ == "__main__":
    key = jax.random.PRNGKey(0)
    k_x, k_adj, k_p, k_x2, k_adj2, k_p2 = jax.random.split(key, 6)

    # --- Test 1: F_out > F_in (fused-weight path), tile-aligned N ----------
    N, F_IN, F_OUT = 128, 32, 64
    x = jax.random.normal(k_x, (N, F_IN), dtype=jnp.float32)
    a_raw = jax.random.uniform(k_adj, (N, N), dtype=jnp.float32)
    a_sym = (a_raw + a_raw.T) * 0.5 + jnp.eye(N, dtype=jnp.float32)
    adj = a_sym / jnp.sum(a_sym, axis=1, keepdims=True)
    weight, bias = init_params(k_p, F_IN, F_OUT, bias=True)

    out = graph_convolution(x, adj, weight, bias)
    jax.block_until_ready(out)
    ref = (adj @ x) @ weight + bias
    assert out.shape == (N, F_OUT)
    # bf16 streaming -> looser tolerance than pure f32
    assert jnp.allclose(out, ref, atol=5e-3, rtol=5e-2), \
        float(jnp.max(jnp.abs(out - ref)))

    # --- Test 2: F_out < F_in (reordered adj @ (x @ w)), ragged N, no bias --
    N2, F_IN2, F_OUT2 = 96, 64, 32
    x2 = jax.random.normal(k_x2, (N2, F_IN2), dtype=jnp.float32)
    a2 = jax.random.uniform(k_adj2, (N2, N2), dtype=jnp.float32)
    a2 = (a2 + a2.T) * 0.5 + jnp.eye(N2, dtype=jnp.float32)
    adj2 = a2 / jnp.sum(a2, axis=1, keepdims=True)
    weight2, _ = init_params(k_p2, F_IN2, F_OUT2, bias=False)

    out2 = graph_convolution(x2, adj2, weight2, None)
    jax.block_until_ready(out2)
    ref2 = (adj2 @ x2) @ weight2
    assert out2.shape == (N2, F_OUT2)
    assert jnp.allclose(out2, ref2, atol=5e-3, rtol=5e-2), \
        float(jnp.max(jnp.abs(out2 - ref2)))

    print("KERNEL_OK")
</pallas_src>

<mosaic_0001>
module attributes {stable_mosaic.version = 11 : i64} {
  func.func @_gcn_kernel_fused_w(%arg0: i32, %arg1: i32, %arg2: memref<128x128xbf16, #tpu.memory_space<vmem>>, %arg3: memref<128x128xbf16, #tpu.memory_space<vmem>>, %arg4: memref<128x128xbf16, #tpu.memory_space<vmem>>, %arg5: memref<1x128xf32, #tpu.memory_space<vmem>>, %arg6: memref<128x128xf32, #tpu.memory_space<vmem>>, %arg7: memref<128x128xf32, #tpu.memory_space<vmem>>) attributes {dimension_semantics = [#tpu.dimension_semantics<parallel>, #tpu.dimension_semantics<arbitrary>], iteration_bounds = array<i64: 1, 1>, scalar_prefetch = 0 : i64, scratch_operands = 1 : i64, tpu.core_type = #tpu.core_type<tc>, window_params = [{transform_indices = @transform_0, window_bounds = array<i64: 128, 128>}, {transform_indices = @transform_1, window_bounds = array<i64: 128, 128>}, {pipeline_mode = #tpu.pipeline_mode<synchronous>, transform_indices = @transform_2, window_bounds = array<i64: 128, 128>}, {pipeline_mode = #tpu.pipeline_mode<synchronous>, transform_indices = @transform_3, window_bounds = array<i64: 1, 128>}, {transform_indices = @transform_4, window_bounds = array<i64: 128, 128>}]} {
    %c0_i32 = arith.constant 0 : i32
    %0 = arith.cmpi eq, %arg1, %c0_i32 : i32
    %1 = arith.extui %0 : i1 to i32
    %c0_i32_0 = arith.constant 0 : i32
    %2 = arith.cmpi ne, %1, %c0_i32_0 : i32
    scf.if %2 {
      %cst_10 = arith.constant 0.000000e+00 : f32
      %12 = vector.broadcast %cst_10 : f32 to vector<128x128xf32>
      %c0_11 = arith.constant 0 : index
      %c0_12 = arith.constant 0 : index
      %13 = vector.load %arg7[%c0_11, %c0_12] : memref<128x128xf32, #tpu.memory_space<vmem>>, vector<128x128xf32>
      tpu.vector_store %arg7[%c0_11, %c0_12], %12 {strides = array<i32>} : memref<128x128xf32, #tpu.memory_space<vmem>>, vector<128x128xf32>,
    } else {
    }
    %c0 = arith.constant 0 : index
    %c0_1 = arith.constant 0 : index
    %3 = vector.load %arg7[%c0, %c0_1] : memref<128x128xf32, #tpu.memory_space<vmem>>, vector<128x128xf32>
    %c0_2 = arith.constant 0 : index
    %c0_3 = arith.constant 0 : index
    %4 = vector.load %arg2[%c0_2, %c0_3] : memref<128x128xbf16, #tpu.memory_space<vmem>>, vector<128x128xbf16>
    %c0_4 = arith.constant 0 : index
    %c0_5 = arith.constant 0 : index
    %5 = vector.load %arg3[%c0_4, %c0_5] : memref<128x128xbf16, #tpu.memory_space<vmem>>, vector<128x128xbf16>
    %cst = arith.constant dense<0.000000e+00> : vector<128x128xf32>
    %6 = tpu.matmul %4, %5, %cst {dimension_numbers = #tpu.dot_dimension_numbers<[1], [0], [0], [1], [0, 0, 1, 1], [], []>} : vector<128x128xbf16>, vector<128x128xbf16>, vector<128x128xf32> -> vector<128x128xf32>
    %7 = arith.addf %3, %6 : vector<128x128xf32>
    %c0_6 = arith.constant 0 : index
    %c0_7 = arith.constant 0 : index
    %8 = vector.load %arg7[%c0_6, %c0_7] : memref<128x128xf32, #tpu.memory_space<vmem>>, vector<128x128xf32>
    tpu.vector_store %arg7[%c0_6, %c0_7], %7 {strides = array<i32>} : memref<128x128xf32, #tpu.memory_space<vmem>>, vector<128x128xf32>,
    %c0_i32_8 = arith.constant 0 : i32
    %9 = arith.cmpi eq, %arg1, %c0_i32_8 : i32
    %10 = arith.extui %9 : i1 to i32
    %c0_i32_9 = arith.constant 0 : i32
    %11 = arith.cmpi ne, %10, %c0_i32_9 : i32
    scf.if %11 {
      %c0_10 = arith.constant 0 : index
      %c0_11 = arith.constant 0 : index
      %12 = vector.load %arg7[%c0_10, %c0_11] : memref<128x128xf32, #tpu.memory_space<vmem>>, vector<128x128xf32>
      %13 = arith.truncf %12 : vector<128x128xf32> to vector<128x128xbf16>
      %c0_12 = arith.constant 0 : index
      %c0_13 = arith.constant 0 : index
      %14 = vector.load %arg4[%c0_12, %c0_13] : memref<128x128xbf16, #tpu.memory_space<vmem>>, vector<128x128xbf16>
      %cst_14 = arith.constant dense<0.000000e+00> : vector<128x128xf32>
      %15 = tpu.matmul %13, %14, %cst_14 {dimension_numbers = #tpu.dot_dimension_numbers<[1], [0], [0], [1], [0, 0, 1, 1], [], []>} : vector<128x128xbf16>, vector<128x128xbf16>, vector<128x128xf32> -> vector<128x128xf32>
      %c0_15 = arith.constant 0 : index
      %c0_16 = arith.constant 0 : index
      %16 = vector.load %arg5[%c0_15, %c0_16] : memref<1x128xf32, #tpu.memory_space<vmem>>, vector<1x128xf32>
      %17 = vector.broadcast %16 : vector<1x128xf32> to vector<128x128xf32>
      %18 = arith.addf %15, %17 : vector<128x128xf32>
      %c0_17 = arith.constant 0 : index
      %c0_18 = arith.constant 0 : index
      %19 = vector.load %arg6[%c0_17, %c0_18] : memref<128x128xf32, #tpu.memory_space<vmem>>, vector<128x128xf32>
      tpu.vector_store %arg6[%c0_17, %c0_18], %18 {strides = array<i32>} : memref<128x128xf32, #tpu.memory_space<vmem>>, vector<128x128xf32>,
    } else {
    }
    return
  }
  func.func @transform_0(%arg0: i32, %arg1: i32) -> (i32, i32) {
    %c0_i32 = arith.constant 0 : i32
    return %arg0, %arg1 : i32, i32
  }
  func.func @transform_1(%arg0: i32, %arg1: i32) -> (i32, i32) {
    %c0_i32 = arith.constant 0 : i32
    %c0_i32_0 = arith.constant 0 : i32
    return %arg1, %c0_i32 : i32, i32
  }
  func.func @transform_2(%arg0: i32, %arg1: i32) -> (i32, i32) {
    %c0_i32 = arith.constant 0 : i32
    %c0_i32_0 = arith.constant 0 : i32
    %c0_i32_1 = arith.constant 0 : i32
    return %c0_i32, %c0_i32_0 : i32, i32
  }
  func.func @transform_3(%arg0: i32, %arg1: i32) -> (i32, i32) {
    %c0_i32 = arith.constant 0 : i32
    %c0_i32_0 = arith.constant 0 : i32
    %c0_i32_1 = arith.constant 0 : i32
    return %c0_i32, %c0_i32_0 : i32, i32
  }
  func.func @transform_4(%arg0: i32, %arg1: i32) -> (i32, i32) {
    %c0_i32 = arith.constant 0 : i32
    %c0_i32_0 = arith.constant 0 : i32
    return %arg0, %c0_i32 : i32, i32
  }
}

</mosaic_0001>

<llo_original>
// kernel: tpu_custom_call.1
$region0: #{tpu_custom_call.1}
  #allocation0 [shape = 'u32[]', space=smem, size = 0x4, offset = 0x4, fixed_abs, tag = 'smem constant byte address 0x4 - core index']
  #allocation1 [shape = 'u32[72,128]{1,0:T(1,128)}', space=vmem, size = 0x9000, scoped, tag = 'internal scratch']
  #allocation2 [shape = 'f32[128,128]{1,0:T(8,128)}', space=vmem, size = 0x10000, scoped, tag = 'scratch operand']
  %s0 = inlined_call_operand.hbm [shape: bf16[128,128], index: 0, kind: input, shape index: {}]
  %s1 = inlined_call_operand.hbm [shape: bf16[128,128], index: 1, kind: input, shape index: {}]
  %s2 = inlined_call_operand.hbm [shape: bf16[128,128], index: 2, kind: input, shape index: {}]
  %s3 = inlined_call_operand.vmem [shape: f32[1,128], index: 3, kind: input, shape index: {}]
  %s4 = inlined_call_operand.hbm [shape: f32[128,128], index: 4, kind: output, shape index: {}]
  %s5 = sld [smem:[#allocation0]]
  $region46: #{tpu_custom_call.1} parent=0
    _
  %s7 = ssub.s32 1, %s5
  %s8 = scalar_select 0, %s7, %s5
  $region1: #{tpu_custom_call.1} parent=0
    #allocation3 [shape = 'u8[32768]{0}', space=vmem, size = 0x8000, scoped, tag = 'input window, operand 0, single buffered']
    #allocation4 [shape = 's32[1]{0}', space=sflag, size = 0x4, scoped, tag = 'scoped memory for tpu_custom_call.1']
    #allocation5 [shape = 's32[1]{0}', space=sflag, size = 0x4, scoped, tag = 'scoped memory for tpu_custom_call.1']
    #allocation6 [shape = 'u8[32768]{0}', space=vmem, size = 0x8000, scoped, tag = 'input window, operand 1, single buffered']
    #allocation7 [shape = 's32[1]{0}', space=sflag, size = 0x4, scoped, tag = 'scoped memory for tpu_custom_call.1']
    #allocation8 [shape = 'u8[32768]{0}', space=vmem, size = 0x8000, scoped, tag = 'input window, operand 2, single buffered']
    #allocation9 [shape = 'u8[65536]{0}', space=vmem, size = 0x10000, scoped, tag = 'output window, operand 0, single buffered']
    %9 = vsyncpa [#allocation4], 0
    %10 = vsyncpa [#allocation7], 0
    %11 = vsyncpa [#allocation5], 0
    // Predicated region
    $region2: #{tpu_custom_call.1} parent=1 // pred_check
      _
    $region3: #{tpu_custom_call.1} parent=1 // pred_check_branch
      %13 = sbr.rel (0) target = $region5
    $region4: #{tpu_custom_call.1} parent=1 // pred_region
      %15 = vsyncadd [#allocation4], 0
      %s16 = sshll.u32 %s0, 4
      %s17 = int_to_ptr.hbm [resolvable:$true] %s16
      %s18 = sshll.u32 [#allocation3], 4
      %s19 = int_to_ptr.vmem [resolvable:$true] %s18
      %24 = dma.hbm_to_vmem [thread:$0]  %s17, 1024, %s19, [#allocation4], 64, 64, 4
    $region5: #{tpu_custom_call.1} parent=1 // pred_fallthru
      _
    // Predicated region
    $region6: #{tpu_custom_call.1} parent=1 // pred_check
      _
    $region7: #{tpu_custom_call.1} parent=1 // pred_check_branch
      %26 = sbr.rel (0) target = $region9
    $region8: #{tpu_custom_call.1} parent=1 // pred_region
      %28 = vsyncadd [#allocation7], 0
      %s29 = sshll.u32 %s1, 4
      %s30 = int_to_ptr.hbm [resolvable:$true] %s29
      %s31 = sshll.u32 [#allocation6], 4
      %s32 = int_to_ptr.vmem [resolvable:$true] %s31
      %37 = dma.hbm_to_vmem [thread:$0]  %s30, 1024, %s32, [#allocation7], 64, 64, 4
    $region9: #{tpu_custom_call.1} parent=1 // pred_fallthru
      _
    // Predicated region
    $region10: #{tpu_custom_call.1} parent=1 // pred_check
      _
    $region11: #{tpu_custom_call.1} parent=1 // pred_check_branch
      %39 = sbr.rel (0) target = $region13
    $region12: #{tpu_custom_call.1} parent=1 // pred_region
      %41 = vsyncadd [#allocation7], 0
      %s42 = sshll.u32 %s2, 4
      %s43 = int_to_ptr.hbm [resolvable:$true] %s42
      %s44 = sshll.u32 [#allocation8], 4
      %s45 = int_to_ptr.vmem [resolvable:$true] %s44
      %50 = dma.hbm_to_vmem [thread:$0]  %s43, 1024, %s45, [#allocation7], 64, 64, 4
    $region13: #{tpu_custom_call.1} parent=1 // pred_fallthru
      _
    // Predicated region
    $region14: #{tpu_custom_call.1} parent=1 // pred_check
      _
    $region15: #{tpu_custom_call.1} parent=1 // pred_check_branch
      %52 = sbr.rel (0) target = $region17
    $region16: #{tpu_custom_call.1} parent=1 // pred_region
      _
    $region17: #{tpu_custom_call.1} parent=1 // pred_fallthru
      _
    // Predicated region
    $region18: #{tpu_custom_call.1} parent=1 // pred_check
      _
    $region19: #{tpu_custom_call.1} parent=1 // pred_check_branch
      %54 = sbr.rel (0) target = $region21
    $region20: #{tpu_custom_call.1} parent=1 // pred_region
      %56 = dma.done [#allocation4], 1024
    $region21: #{tpu_custom_call.1} parent=1 // pred_fallthru
      _
    // Predicated region
    $region22: #{tpu_custom_call.1} parent=1 // pred_check
      _
    $region23: #{tpu_custom_call.1} parent=1 // pred_check_branch
      %58 = sbr.rel (0) target = $region25
    $region24: #{tpu_custom_call.1} parent=1 // pred_region
      %60 = dma.done [#allocation7], 1024
    $region25: #{tpu_custom_call.1} parent=1 // pred_fallthru
      _
    // Predicated region
    $region26: #{tpu_custom_call.1} parent=1 // pred_check
      _
    $region27: #{tpu_custom_call.1} parent=1 // pred_check_branch
      %62 = sbr.rel (0) target = $region29
    $region28: #{tpu_custom_call.1} parent=1 // pred_region
      %64 = dma.done [#allocation7], 1024
    $region29: #{tpu_custom_call.1} parent=1 // pred_fallthru
      _
    %p65 = scmp.eq.s32.totalorder 0, 0
    // Predicated region
    $region30: #{tpu_custom_call.1} parent=1 // pred_check
      %p66 = pneg %p65
    $region31: #{tpu_custom_call.1} parent=1 // pred_check_branch
      %68 = sbr.rel (%p66) target = $region33
    $region32: #{tpu_custom_call.1} parent=1 // pred_region
      %69 = vst [vmem:[#allocation2] sm:$0xff] 0.0
      %70 = vst [vmem:[#allocation2 + $0x8] sm:$0xff] 0.0
      %71 = vst [vmem:[#allocation2 + $0x10] sm:$0xff] 0.0
      %72 = vst [vmem:[#allocation2 + $0x18] sm:$0xff] 0.0
      %73 = vst [vmem:[#allocation2 + $0x20] sm:$0xff] 0.0
      %74 = vst [vmem:[#allocation2 + $0x28] sm:$0xff] 0.0
      %75 = vst [vmem:[#allocation2 + $0x30] sm:$0xff] 0.0
      %76 = vst [vmem:[#allocation2 + $0x38] sm:$0xff] 0.0
      %77 = vst [vmem:[#allocation2 + $0x40] sm:$0xff] 0.0
      %78 = vst [vmem:[#allocation2 + $0x48] sm:$0xff] 0.0
      %79 = vst [vmem:[#allocation2 + $0x50] sm:$0xff] 0.0
      %80 = vst [vmem:[#allocation2 + $0x58] sm:$0xff] 0.0
      %81 = vst [vmem:[#allocation2 + $0x60] sm:$0xff] 0.0
      %82 = vst [vmem:[#allocation2 + $0x68] sm:$0xff] 0.0
      %83 = vst [vmem:[#allocation2 + $0x70] sm:$0xff] 0.0
      %84 = vst [vmem:[#allocation2 + $0x78] sm:$0xff] 0.0
    $region33: #{tpu_custom_call.1} parent=1 // pred_fallthru
      _
    %v85 = vld [vmem:[#allocation2] sm:$0xff]
    %v86 = vld [vmem:[#allocation2 + $0x8] sm:$0xff]
    %v87 = vld [vmem:[#allocation2 + $0x10] sm:$0xff]
    %v88 = vld [vmem:[#allocation2 + $0x18] sm:$0xff]
    %v89 = vld [vmem:[#allocation2 + $0x20] sm:$0xff]
    %v90 = vld [vmem:[#allocation2 + $0x28] sm:$0xff]
    %v91 = vld [vmem:[#allocation2 + $0x30] sm:$0xff]
    %v92 = vld [vmem:[#allocation2 + $0x38] sm:$0xff]
    %v93 = vld [vmem:[#allocation2 + $0x40] sm:$0xff]
    %v94 = vld [vmem:[#allocation2 + $0x48] sm:$0xff]
    %v95 = vld [vmem:[#allocation2 + $0x50] sm:$0xff]
    %v96 = vld [vmem:[#allocation2 + $0x58] sm:$0xff]
    %v97 = vld [vmem:[#allocation2 + $0x60] sm:$0xff]
    %v98 = vld [vmem:[#allocation2 + $0x68] sm:$0xff]
    %v99 = vld [vmem:[#allocation2 + $0x70] sm:$0xff]
    %v100 = vld [vmem:[#allocation2 + $0x78] sm:$0xff]
    %v101 = vld [vmem:[#allocation3] sm:$0xf]
    %v102 = vld [vmem:[#allocation3 + $0x4] sm:$0xf]
    %v103 = vld [vmem:[#allocation3 + $0x8] sm:$0xf]
    %v104 = vld [vmem:[#allocation3 + $0xc] sm:$0xf]
    %v105 = vld [vmem:[#allocation3 + $0x10] sm:$0xf]
    %v106 = vld [vmem:[#allocation3 + $0x14] sm:$0xf]
    %v107 = vld [vmem:[#allocation3 + $0x18] sm:$0xf]
    %v108 = vld [vmem:[#allocation3 + $0x1c] sm:$0xf]
    %v109 = vld [vmem:[#allocation3 + $0x20] sm:$0xf]
    %v110 = vld [vmem:[#allocation3 + $0x24] sm:$0xf]
    %v111 = vld [vmem:[#allocation3 + $0x28] sm:$0xf]
    %v112 = vld [vmem:[#allocation3 + $0x2c] sm:$0xf]
    %v113 = vld [vmem:[#allocation3 + $0x30] sm:$0xf]
    %v114 = vld [vmem:[#allocation3 + $0x34] sm:$0xf]
    %v115 = vld [vmem:[#allocation3 + $0x38] sm:$0xf]
    %v116 = vld [vmem:[#allocation3 + $0x3c] sm:$0xf]
    %v117 = vld [vmem:[#allocation6] sm:$0xf]
    %v118 = vld [vmem:[#allocation6 + $0x4] sm:$0xf]
    %v119 = vld [vmem:[#allocation6 + $0x8] sm:$0xf]
    %v120 = vld [vmem:[#allocation6 + $0xc] sm:$0xf]
    %v121 = vld [vmem:[#allocation6 + $0x10] sm:$0xf]
    %v122 = vld [vmem:[#allocation6 + $0x14] sm:$0xf]
    %v123 = vld [vmem:[#allocation6 + $0x18] sm:$0xf]
    %v124 = vld [vmem:[#allocation6 + $0x1c] sm:$0xf]
    %v125 = vld [vmem:[#allocation6 + $0x20] sm:$0xf]
    %v126 = vld [vmem:[#allocation6 + $0x24] sm:$0xf]
    %v127 = vld [vmem:[#allocation6 + $0x28] sm:$0xf]
    %v128 = vld [vmem:[#allocation6 + $0x2c] sm:$0xf]
    %v129 = vld [vmem:[#allocation6 + $0x30] sm:$0xf]
    %v130 = vld [vmem:[#allocation6 + $0x34] sm:$0xf]
    %v131 = vld [vmem:[#allocation6 + $0x38] sm:$0xf]
    %v132 = vld [vmem:[#allocation6 + $0x3c] sm:$0xf]
    %v149 = vunpack.c.l.b16 %v101
    %v150 = vunpack.c.l.b16 %v102
    %v151 = vunpack.c.l.b16 %v103
    %v152 = vunpack.c.l.b16 %v104
    %v153 = vunpack.c.l.b16 %v105
    %v154 = vunpack.c.l.b16 %v106
    %v155 = vunpack.c.l.b16 %v107
    %v156 = vunpack.c.l.b16 %v108
    %v157 = vunpack.c.l.b16 %v109
    %v158 = vunpack.c.l.b16 %v110
    %v159 = vunpack.c.l.b16 %v111
    %v160 = vunpack.c.l.b16 %v112
    %v161 = vunpack.c.l.b16 %v113
    %v162 = vunpack.c.l.b16 %v114
    %v163 = vunpack.c.l.b16 %v115
    %v164 = vunpack.c.l.b16 %v116
    %v165 = vpack.c.b16 %v150, %v149
    %v166 = vpack.c.b16 %v152, %v151
    %v167 = vpack.c.b16 %v154, %v153
    %v168 = vpack.c.b16 %v156, %v155
    %v169 = vpack.c.b16 %v158, %v157
    %v170 = vpack.c.b16 %v160, %v159
    %v171 = vpack.c.b16 %v162, %v161
    %v172 = vpack.c.b16 %v164, %v163
    %v197 = vunpack.c.l.b16 %v117
    %v198 = vunpack.c.l.b16 %v118
    %v199 = vunpack.c.l.b16 %v119
    %v200 = vunpack.c.l.b16 %v120
    %v201 = vunpack.c.l.b16 %v121
    %v202 = vunpack.c.l.b16 %v122
    %v203 = vunpack.c.l.b16 %v123
    %v204 = vunpack.c.l.b16 %v124
    %v205 = vunpack.c.l.b16 %v125
    %v206 = vunpack.c.l.b16 %v126
    %v207 = vunpack.c.l.b16 %v127
    %v208 = vunpack.c.l.b16 %v128
    %v209 = vunpack.c.l.b16 %v129
    %v210 = vunpack.c.l.b16 %v130
    %v211 = vunpack.c.l.b16 %v131
    %v212 = vunpack.c.l.b16 %v132
    %v213 = vpack.c.b16 %v198, %v197
    %v214 = vpack.c.b16 %v200, %v199
    %v215 = vpack.c.b16 %v202, %v201
    %v216 = vpack.c.b16 %v204, %v203
    %v217 = vpack.c.b16 %v206, %v205
    %v218 = vpack.c.b16 %v208, %v207
    %v219 = vpack.c.b16 %v210, %v209
    %v220 = vpack.c.b16 %v212, %v211
    %229 = vmatpush.bf16.msra.mxu0 %v220
    %230 = vmatpush.bf16.msra.mxu0 %v219
    %231 = vmatpush.bf16.msra.mxu0 %v218
    %232 = vmatpush.bf16.msra.mxu0 %v217
    %233 = vmatpush.bf16.msra.mxu0 %v216
    %234 = vmatpush.bf16.msra.mxu0 %v215
    %235 = vmatpush.bf16.msra.mxu0 %v214
    %236 = vmatpush.bf16.msra.mxu0 %v213
    %237 = vmatmul.bf16.gmra.mxu0 %v165
    %v238 = vpop.f32.mrf.mxu0
    %v239 = vadd.f32 0.0, %v238
    %v240 = vpop.f32.mrf.mxu0
    %v241 = vadd.f32 0.0, %v240
    %242 = vmatmul.bf16.gmra.mxu0 %v166
    %v243 = vpop.f32.mrf.mxu0
    %v244 = vadd.f32 0.0, %v243
    %v245 = vpop.f32.mrf.mxu0
    %v246 = vadd.f32 0.0, %v245
    %247 = vmatmul.bf16.gmra.mxu0 %v167
    %v248 = vpop.f32.mrf.mxu0
    %v249 = vadd.f32 0.0, %v248
    %v250 = vpop.f32.mrf.mxu0
    %v251 = vadd.f32 0.0, %v250
    %252 = vmatmul.bf16.gmra.mxu0 %v168
    %v253 = vpop.f32.mrf.mxu0
    %v254 = vadd.f32 0.0, %v253
    %v255 = vpop.f32.mrf.mxu0
    %v256 = vadd.f32 0.0, %v255
    %257 = vmatmul.bf16.gmra.mxu0 %v169
    %v258 = vpop.f32.mrf.mxu0
    %v259 = vadd.f32 0.0, %v258
    %v260 = vpop.f32.mrf.mxu0
    %v261 = vadd.f32 0.0, %v260
    %262 = vmatmul.bf16.gmra.mxu0 %v170
    %v263 = vpop.f32.mrf.mxu0
    %v264 = vadd.f32 0.0, %v263
    %v265 = vpop.f32.mrf.mxu0
    %v266 = vadd.f32 0.0, %v265
    %267 = vmatmul.bf16.gmra.mxu0 %v171
    %v268 = vpop.f32.mrf.mxu0
    %v269 = vadd.f32 0.0, %v268
    %v270 = vpop.f32.mrf.mxu0
    %v271 = vadd.f32 0.0, %v270
    %272 = vmatmul.bf16.gmra.mxu0 %v172
    %v273 = vpop.f32.mrf.mxu0
    %v274 = vadd.f32 0.0, %v273
    %v275 = vpop.f32.mrf.mxu0
    %v276 = vadd.f32 0.0, %v275
    %277 = vdwg.mxu0
    %v278 = vadd.f32 %v85, %v239
    %v279 = vadd.f32 %v86, %v241
    %v280 = vadd.f32 %v87, %v244
    %v281 = vadd.f32 %v88, %v246
    %v282 = vadd.f32 %v89, %v249
    %v283 = vadd.f32 %v90, %v251
    %v284 = vadd.f32 %v91, %v254
    %v285 = vadd.f32 %v92, %v256
    %v286 = vadd.f32 %v93, %v259
    %v287 = vadd.f32 %v94, %v261
    %v288 = vadd.f32 %v95, %v264
    %v289 = vadd.f32 %v96, %v266
    %v290 = vadd.f32 %v97, %v269
    %v291 = vadd.f32 %v98, %v271
    %v292 = vadd.f32 %v99, %v274
    %v293 = vadd.f32 %v100, %v276
    %294 = vst [vmem:[#allocation2] sm:$0xff] %v278
    %295 = vst [vmem:[#allocation2 + $0x8] sm:$0xff] %v279
    %296 = vst [vmem:[#allocation2 + $0x10] sm:$0xff] %v280
    %297 = vst [vmem:[#allocation2 + $0x18] sm:$0xff] %v281
    %298 = vst [vmem:[#allocation2 + $0x20] sm:$0xff] %v282
    %299 = vst [vmem:[#allocation2 + $0x28] sm:$0xff] %v283
    %300 = vst [vmem:[#allocation2 + $0x30] sm:$0xff] %v284
    %301 = vst [vmem:[#allocation2 + $0x38] sm:$0xff] %v285
    %302 = vst [vmem:[#allocation2 + $0x40] sm:$0xff] %v286
    %303 = vst [vmem:[#allocation2 + $0x48] sm:$0xff] %v287
    %304 = vst [vmem:[#allocation2 + $0x50] sm:$0xff] %v288
    %305 = vst [vmem:[#allocation2 + $0x58] sm:$0xff] %v289
    %306 = vst [vmem:[#allocation2 + $0x60] sm:$0xff] %v290
    %307 = vst [vmem:[#allocation2 + $0x68] sm:$0xff] %v291
    %308 = vst [vmem:[#allocation2 + $0x70] sm:$0xff] %v292
    %309 = vst [vmem:[#allocation2 + $0x78] sm:$0xff] %v293
    // Predicated region
    $region34: #{tpu_custom_call.1} parent=1 // pred_check
      %p310 = pneg %p65
    $region35: #{tpu_custom_call.1} parent=1 // pred_check_branch
      %312 = sbr.rel (%p310) target = $region37
    $region36: #{tpu_custom_call.1} parent=1 // pred_region
      %v313 = vld [vmem:[#allocation2] sm:$0xff]
      %v314 = vld [vmem:[#allocation2 + $0x8] sm:$0xff]
      %v315 = vld [vmem:[#allocation2 + $0x10] sm:$0xff]
      %v316 = vld [vmem:[#allocation2 + $0x18] sm:$0xff]
      %v317 = vld [vmem:[#allocation2 + $0x20] sm:$0xff]
      %v318 = vld [vmem:[#allocation2 + $0x28] sm:$0xff]
      %v319 = vld [vmem:[#allocation2 + $0x30] sm:$0xff]
      %v320 = vld [vmem:[#allocation2 + $0x38] sm:$0xff]
      %v321 = vld [vmem:[#allocation2 + $0x40] sm:$0xff]
      %v322 = vld [vmem:[#allocation2 + $0x48] sm:$0xff]
      %v323 = vld [vmem:[#allocation2 + $0x50] sm:$0xff]
      %v324 = vld [vmem:[#allocation2 + $0x58] sm:$0xff]
      %v325 = vld [vmem:[#allocation2 + $0x60] sm:$0xff]
      %v326 = vld [vmem:[#allocation2 + $0x68] sm:$0xff]
      %v327 = vld [vmem:[#allocation2 + $0x70] sm:$0xff]
      %v328 = vld [vmem:[#allocation2 + $0x78] sm:$0xff]
      %v329 = vpack.c.bf16 %v314, %v313
      %v330 = vpack.c.bf16 %v316, %v315
      %v331 = vpack.c.bf16 %v318, %v317
      %v332 = vpack.c.bf16 %v320, %v319
      %v333 = vpack.c.bf16 %v322, %v321
      %v334 = vpack.c.bf16 %v324, %v323
      %v335 = vpack.c.bf16 %v326, %v325
      %v336 = vpack.c.bf16 %v328, %v327
      %v337 = vld [vmem:[#allocation8] sm:$0xf]
      %v338 = vld [vmem:[#allocation8 + $0x4] sm:$0xf]
      %v339 = vld [vmem:[#allocation8 + $0x8] sm:$0xf]
      %v340 = vld [vmem:[#allocation8 + $0xc] sm:$0xf]
      %v341 = vld [vmem:[#allocation8 + $0x10] sm:$0xf]
      %v342 = vld [vmem:[#allocation8 + $0x14] sm:$0xf]
      %v343 = vld [vmem:[#allocation8 + $0x18] sm:$0xf]
      %v344 = vld [vmem:[#allocation8 + $0x1c] sm:$0xf]
      %v345 = vld [vmem:[#allocation8 + $0x20] sm:$0xf]
      %v346 = vld [vmem:[#allocation8 + $0x24] sm:$0xf]
      %v347 = vld [vmem:[#allocation8 + $0x28] sm:$0xf]
      %v348 = vld [vmem:[#allocation8 + $0x2c] sm:$0xf]
      %v349 = vld [vmem:[#allocation8 + $0x30] sm:$0xf]
      %v350 = vld [vmem:[#allocation8 + $0x34] sm:$0xf]
      %v351 = vld [vmem:[#allocation8 + $0x38] sm:$0xf]
      %v352 = vld [vmem:[#allocation8 + $0x3c] sm:$0xf]
      %v353 = vld [vmem:[%s3] sm:$0x1]
      %v355 = vperm.slane %v353, 0
      %v373 = vunpack.c.l.b16 %v337
      %v374 = vunpack.c.l.b16 %v338
      %v375 = vunpack.c.l.b16 %v339
      %v376 = vunpack.c.l.b16 %v340
      %v377 = vunpack.c.l.b16 %v341
      %v378 = vunpack.c.l.b16 %v342
      %v379 = vunpack.c.l.b16 %v343
      %v380 = vunpack.c.l.b16 %v344
      %v381 = vunpack.c.l.b16 %v345
      %v382 = vunpack.c.l.b16 %v346
      %v383 = vunpack.c.l.b16 %v347
      %v384 = vunpack.c.l.b16 %v348
      %v385 = vunpack.c.l.b16 %v349
      %v386 = vunpack.c.l.b16 %v350
      %v387 = vunpack.c.l.b16 %v351
      %v388 = vunpack.c.l.b16 %v352
      %v389 = vpack.c.b16 %v374, %v373
      %v390 = vpack.c.b16 %v376, %v375
      %v391 = vpack.c.b16 %v378, %v377
      %v392 = vpack.c.b16 %v380, %v379
      %v393 = vpack.c.b16 %v382, %v381
      %v394 = vpack.c.b16 %v384, %v383
      %v395 = vpack.c.b16 %v386, %v385
      %v396 = vpack.c.b16 %v388, %v387
      %405 = vmatpush.bf16.msra.mxu0 %v396
      %406 = vmatpush.bf16.msra.mxu0 %v395
      %407 = vmatpush.bf16.msra.mxu0 %v394
      %408 = vmatpush.bf16.msra.mxu0 %v393
      %409 = vmatpush.bf16.msra.mxu0 %v392
      %410 = vmatpush.bf16.msra.mxu0 %v391
      %411 = vmatpush.bf16.msra.mxu0 %v390
      %412 = vmatpush.bf16.msra.mxu0 %v389
      %413 = vmatmul.bf16.gmra.mxu0 %v329
      %v414 = vpop.f32.mrf.mxu0
      %v415 = vadd.f32 %v355, %v414
      %v416 = vpop.f32.mrf.mxu0
      %v417 = vadd.f32 %v355, %v416
      %418 = vmatmul.bf16.gmra.mxu0 %v330
      %v419 = vpop.f32.mrf.mxu0
      %v420 = vadd.f32 %v355, %v419
      %v421 = vpop.f32.mrf.mxu0
      %v422 = vadd.f32 %v355, %v421
      %423 = vmatmul.bf16.gmra.mxu0 %v331
      %v424 = vpop.f32.mrf.mxu0
      %v425 = vadd.f32 %v355, %v424
      %v426 = vpop.f32.mrf.mxu0
      %v427 = vadd.f32 %v355, %v426
      %428 = vmatmul.bf16.gmra.mxu0 %v332
      %v429 = vpop.f32.mrf.mxu0
      %v430 = vadd.f32 %v355, %v429
      %v431 = vpop.f32.mrf.mxu0
      %v432 = vadd.f32 %v355, %v431
      %433 = vmatmul.bf16.gmra.mxu0 %v333
      %v434 = vpop.f32.mrf.mxu0
      %v435 = vadd.f32 %v355, %v434
      %v436 = vpop.f32.mrf.mxu0
      %v437 = vadd.f32 %v355, %v436
      %438 = vmatmul.bf16.gmra.mxu0 %v334
      %v439 = vpop.f32.mrf.mxu0
      %v440 = vadd.f32 %v355, %v439
      %v441 = vpop.f32.mrf.mxu0
      %v442 = vadd.f32 %v355, %v441
      %443 = vmatmul.bf16.gmra.mxu0 %v335
      %v444 = vpop.f32.mrf.mxu0
      %v445 = vadd.f32 %v355, %v444
      %v446 = vpop.f32.mrf.mxu0
      %v447 = vadd.f32 %v355, %v446
      %448 = vmatmul.bf16.gmra.mxu0 %v336
      %v449 = vpop.f32.mrf.mxu0
      %v450 = vadd.f32 %v355, %v449
      %v451 = vpop.f32.mrf.mxu0
      %v452 = vadd.f32 %v355, %v451
      %453 = vdwg.mxu0
      %454 = vst [vmem:[#allocation9] sm:$0xff] %v415
      %455 = vst [vmem:[#allocation9 + $0x8] sm:$0xff] %v417
      %456 = vst [vmem:[#allocation9 + $0x10] sm:$0xff] %v420
      %457 = vst [vmem:[#allocation9 + $0x18] sm:$0xff] %v422
      %458 = vst [vmem:[#allocation9 + $0x20] sm:$0xff] %v425
      %459 = vst [vmem:[#allocation9 + $0x28] sm:$0xff] %v427
      %460 = vst [vmem:[#allocation9 + $0x30] sm:$0xff] %v430
      %461 = vst [vmem:[#allocation9 + $0x38] sm:$0xff] %v432
      %462 = vst [vmem:[#allocation9 + $0x40] sm:$0xff] %v435
      %463 = vst [vmem:[#allocation9 + $0x48] sm:$0xff] %v437
      %464 = vst [vmem:[#allocation9 + $0x50] sm:$0xff] %v440
      %465 = vst [vmem:[#allocation9 + $0x58] sm:$0xff] %v442
      %466 = vst [vmem:[#allocation9 + $0x60] sm:$0xff] %v445
      %467 = vst [vmem:[#allocation9 + $0x68] sm:$0xff] %v447
      %468 = vst [vmem:[#allocation9 + $0x70] sm:$0xff] %v450
      %469 = vst [vmem:[#allocation9 + $0x78] sm:$0xff] %v452
    $region37: #{tpu_custom_call.1} parent=1 // pred_fallthru
      _
    // Predicated region
    $region38: #{tpu_custom_call.1} parent=1 // pred_check
      _
    $region39: #{tpu_custom_call.1} parent=1 // pred_check_branch
      %471 = sbr.rel (0) target = $region41
    $region40: #{tpu_custom_call.1} parent=1 // pred_region
      %473 = vsyncadd [#allocation5], 0
      %s474 = sshll.u32 [#allocation9], 4
      %s475 = int_to_ptr.vmem [resolvable:$true] %s474
      %s476 = sshll.u32 %s4, 4
      %s477 = int_to_ptr.hbm [resolvable:$true] %s476
      %482 = dma.vmem_to_hbm [thread:$0]  %s475, 2048, %s477, [#allocation5], 128, 128, 8
    $region41: #{tpu_custom_call.1} parent=1 // pred_fallthru
      _
    // Predicated region
    $region42: #{tpu_custom_call.1} parent=1 // pred_check
      _
    $region43: #{tpu_custom_call.1} parent=1 // pred_check_branch
      %484 = sbr.rel (0) target = $region45
    $region44: #{tpu_custom_call.1} parent=1 // pred_region
      %486 = dma.done [#allocation5], 2048
    $region45: #{tpu_custom_call.1} parent=1 // pred_fallthru
      _
    %487 = vsyncpa [#allocation4], 1
    %488 = vsyncpa [#allocation7], 1
    %489 = vsyncpa [#allocation5], 1

</llo_original>
